<compile_context>
chip_gen: v7x
topology: tpu7x:2x2x1
jax: 0.10.0
libtpu: 0.0.40
codegen_flags: <defaults>
</compile_context>

<pallas_src>
import math

import jax
import jax.numpy as jnp
from jax.experimental import pallas as pl
from jax.experimental.pallas import tpu as pltpu


# ----------------------------------------------------------------------------
# Parameter / buffer setup (mirrors PositionalEncoding300k.__init__)
# ----------------------------------------------------------------------------
def make_pe(text_len: int, max_len: int = 3000) -> jnp.ndarray:
    """Positional-encoding buffer, stored compactly as (max_len, text_len, 1).

    The PyTorch buffer is (max_len, text_len, 300) but is constant along the
    trailing repeat dim, so we keep only one copy and broadcast in-kernel.
    """
    assert text_len % 2 == 0, "text_len must be even (0::2 / 1::2 interleave)"
    position = jnp.arange(max_len, dtype=jnp.float32)[:, None]          # (max_len, 1)
    div_term = jnp.exp(
        jnp.arange(0, text_len, 2, dtype=jnp.float32)
        * (-math.log(10000.0) / text_len)
    )                                                                    # (text_len//2,)
    angles = position * div_term                                         # (max_len, text_len//2)
    pe = jnp.zeros((max_len, text_len), dtype=jnp.float32)
    pe = pe.at[:, 0::2].set(jnp.sin(angles))
    pe = pe.at[:, 1::2].set(jnp.cos(angles))
    return pe[:, :, None]                                                # (max_len, text_len, 1)


# ----------------------------------------------------------------------------
# Pallas kernel: elementwise add with in-kernel lane broadcast of pe
# ----------------------------------------------------------------------------
def _add_pe_kernel(x_ref, pe_ref, o_ref):
    # x_ref : (TS, L, R)   pe_ref : (TS, L, 1) f32   o_ref : (TS, L, R)
    # Add in f32 (matches PyTorch fp32 buffer math), cast on store.
    x = x_ref[...].astype(jnp.float32)
    o_ref[...] = (x + pe_ref[...]).astype(o_ref.dtype)


# ----------------------------------------------------------------------------
# Tile-size heuristic
# ----------------------------------------------------------------------------
def _pick_seq_tile(seq_len: int, text_len: int, repeat: int,
                   x_itemsize: int, out_itemsize: int,
                   vmem_budget_bytes: int = 12 * 1024 * 1024,
                   min_grid_steps: int = 4) -> int:
    """Pick an S-tile that (a) fits a conservative VMEM budget (safe for v5e's
    16 MiB scoped default, leaves room on v6e/v7x) and (b) keeps the grid at
    >= `min_grid_steps` steps when S is large enough, so the read / compute /
    writeback streams overlap and v7x's 2 TensorCores both receive tiles."""
    lanes = -(-repeat // 128) * 128          # 300 -> 384 padded lanes
    sublanes = -(-text_len // 8) * 8         # pad to sublane multiple
    x_row = sublanes * lanes * x_itemsize            # x tile bytes per seq row
    out_row = sublanes * lanes * out_itemsize        # out tile bytes per seq row
    pe_row = sublanes * 128 * 4                      # (ts, L, 1) lane-pads to 128, f32
    # Each stream (x, out, pe) is double-buffered by the Pallas pipeline.
    bytes_per_row = 2 * (x_row + out_row + pe_row)
    ts_vmem = max(8, vmem_budget_bytes // bytes_per_row)
    # Keep multiple grid steps so the pipeline can overlap and megacore splits work.
    ts_steps = max(8, pl.cdiv(seq_len, min_grid_steps))
    return int(min(seq_len, ts_vmem, ts_steps))


# ----------------------------------------------------------------------------
# Forward pass
# ----------------------------------------------------------------------------
def positional_encoding_300k(x: jnp.ndarray, pe: jnp.ndarray,
                             repeat: int = 300,
                             donate_x: bool = False) -> jnp.ndarray:
    """Forward pass of PositionalEncoding300k (dropout in eval mode = identity).

    x  : (S, text_len, 300)
    pe : (max_len, text_len, 1) float32  (from make_pe)
    """
    S, L, R = x.shape
    max_len, L_pe, _ = pe.shape
    assert R == repeat, f"last dim must be {repeat}, got {R}"
    assert L == L_pe, "text_len mismatch between x and pe"
    assert S <= max_len, "sequence length exceeds max_len"

    # PyTorch promotes x + fp32 buffer -> fp32 for bf16/fp16 inputs.
    out_dtype = jnp.promote_types(x.dtype, pe.dtype)

    ts = _pick_seq_tile(S, L, R,
                        jnp.dtype(x.dtype).itemsize,
                        jnp.dtype(out_dtype).itemsize)
    grid = (pl.cdiv(S, ts),)

    # Aliasing only valid if input and output buffers have identical dtype/shape.
    io_aliases = {0: 0} if (donate_x and x.dtype == out_dtype) else {}

    out = pl.pallas_call(
        _add_pe_kernel,
        out_shape=jax.ShapeDtypeStruct((S, L, R), out_dtype),
        grid_spec=pltpu.PrefetchScalarGridSpec(
            num_scalar_prefetch=0,
            grid=grid,
            in_specs=[
                pl.BlockSpec((ts, L, R), lambda i: (i, 0, 0)),   # x tile
                pl.BlockSpec((ts, L, 1), lambda i: (i, 0, 0)),   # pe rows (no slice/cast in wrapper)
            ],
            out_specs=pl.BlockSpec((ts, L, R), lambda i: (i, 0, 0)),
        ),
        compiler_params=pltpu.CompilerParams(
            dimension_semantics=("parallel",),   # lets v7x's 2 TCs split the S-tiles
        ),
        input_output_aliases=io_aliases,
    )(x, pe)

    # nn.Dropout(p=0.1) in eval mode is the identity.
    # TODO(synk): training-mode dropout (pltpu.prng_random_bits + 1/(1-p) scaling) not implemented.
    return out


# ----------------------------------------------------------------------------
# Demo / self-check
# ----------------------------------------------------------------------------
if __name__ == "__main__":
    TEXT_LEN = 8      # must be even (matches the 0::2 / 1::2 interleave)
    MAX_LEN = 64
    REPEAT = 300      # fixed by the module (torch.ones(300))

    pe = make_pe(TEXT_LEN, MAX_LEN)                       # (MAX_LEN, TEXT_LEN, 1)
    pe_full = pe * jnp.ones((REPEAT,), dtype=jnp.float32)  # PyTorch-style full buffer

    key = jax.random.PRNGKey(0)
    k1, k2, k3 = jax.random.split(key, 3)

    # --- Test 1: single-tile case (S=8, f32) -------------------------------
    SEQ1 = 8
    x1 = jax.random.normal(k1, (SEQ1, TEXT_LEN, REPEAT), dtype=jnp.float32)
    out1 = jax.block_until_ready(positional_encoding_300k(x1, pe, repeat=REPEAT))
    ref1 = x1 + pe_full[:SEQ1]
    assert out1.shape == (SEQ1, TEXT_LEN, REPEAT)
    assert out1.dtype == jnp.float32
    assert jnp.allclose(out1, ref1, atol=1e-6, rtol=1e-6)

    # --- Test 2: multi-step grid with ragged last tile (S=20 -> tiles 8,8,4) ---
    SEQ2 = 20
    x2 = jax.random.normal(k2, (SEQ2, TEXT_LEN, REPEAT), dtype=jnp.float32)
    out2 = jax.block_until_ready(positional_encoding_300k(x2, pe, repeat=REPEAT))
    ref2 = x2 + pe_full[:SEQ2]
    assert out2.shape == (SEQ2, TEXT_LEN, REPEAT)
    assert jnp.allclose(out2, ref2, atol=1e-6, rtol=1e-6)

    # --- Test 3: bf16 input -> fp32 output (PyTorch type promotion) --------
    SEQ3 = 12
    x3 = jax.random.normal(k3, (SEQ3, TEXT_LEN, REPEAT), dtype=jnp.float32)
    x3 = x3.astype(jnp.bfloat16)
    out3 = jax.block_until_ready(positional_encoding_300k(x3, pe, repeat=REPEAT))
    ref3 = x3.astype(jnp.float32) + pe_full[:SEQ3]
    assert out3.dtype == jnp.float32
    assert jnp.allclose(out3, ref3, atol=1e-6, rtol=1e-6)

    print("KERNEL_OK")
</pallas_src>

<mosaic_0001>
module attributes {stable_mosaic.version = 11 : i64} {
  func.func @_add_pe_kernel(%arg0: i32, %arg1: memref<8x8x300xf32, #tpu.memory_space<vmem>>, %arg2: memref<8x8x1xf32, #tpu.memory_space<vmem>>, %arg3: memref<8x8x300xf32, #tpu.memory_space<vmem>>) attributes {dimension_semantics = [#tpu.dimension_semantics<parallel>], iteration_bounds = array<i64: 1>, scalar_prefetch = 0 : i64, scratch_operands = 0 : i64, tpu.core_type = #tpu.core_type<tc>, window_params = [{transform_indices = @transform_0, window_bounds = array<i64: 8, 8, 300>}, {transform_indices = @transform_1, window_bounds = array<i64: 8, 8, 1>}, {transform_indices = @transform_2, window_bounds = array<i64: 8, 8, 300>}]} {
    %c0 = arith.constant 0 : index
    %c0_0 = arith.constant 0 : index
    %c0_1 = arith.constant 0 : index
    %0 = vector.load %arg1[%c0, %c0_0, %c0_1] : memref<8x8x300xf32, #tpu.memory_space<vmem>>, vector<8x8x300xf32>
    %c0_2 = arith.constant 0 : index
    %c0_3 = arith.constant 0 : index
    %c0_4 = arith.constant 0 : index
    %1 = vector.load %arg2[%c0_2, %c0_3, %c0_4] : memref<8x8x1xf32, #tpu.memory_space<vmem>>, vector<8x8x1xf32>
    %2 = vector.broadcast %1 : vector<8x8x1xf32> to vector<8x8x300xf32>
    %3 = arith.addf %0, %2 : vector<8x8x300xf32>
    %c0_5 = arith.constant 0 : index
    %c0_6 = arith.constant 0 : index
    %c0_7 = arith.constant 0 : index
    %4 = vector.load %arg3[%c0_5, %c0_6, %c0_7] : memref<8x8x300xf32, #tpu.memory_space<vmem>>, vector<8x8x300xf32>
    tpu.vector_store %arg3[%c0_5, %c0_6, %c0_7], %3 {strides = array<i32>} : memref<8x8x300xf32, #tpu.memory_space<vmem>>, vector<8x8x300xf32>,
    return
  }
  func.func @transform_0(%arg0: i32) -> (i32, i32, i32) {
    %c0_i32 = arith.constant 0 : i32
    %c0_i32_0 = arith.constant 0 : i32
    %c0_i32_1 = arith.constant 0 : i32
    return %arg0, %c0_i32, %c0_i32_0 : i32, i32, i32
  }
  func.func @transform_1(%arg0: i32) -> (i32, i32, i32) {
    %c0_i32 = arith.constant 0 : i32
    %c0_i32_0 = arith.constant 0 : i32
    %c0_i32_1 = arith.constant 0 : i32
    return %arg0, %c0_i32, %c0_i32_0 : i32, i32, i32
  }
  func.func @transform_2(%arg0: i32) -> (i32, i32, i32) {
    %c0_i32 = arith.constant 0 : i32
    %c0_i32_0 = arith.constant 0 : i32
    %c0_i32_1 = arith.constant 0 : i32
    return %arg0, %c0_i32, %c0_i32_0 : i32, i32, i32
  }
}

</mosaic_0001>

<llo_original>
// kernel: tpu_custom_call.1
$region0: #{tpu_custom_call.1}
  #allocation0 [shape = 'u32[]', space=smem, size = 0x4, offset = 0x4, fixed_abs, tag = 'smem constant byte address 0x4 - core index']
  #allocation1 [shape = 'u32[144,128]{1,0:T(1,128)}', space=vmem, size = 0x12000, scoped, tag = 'internal scratch']
  %s0 = inlined_call_operand.vmem [shape: f32[8,8,300], index: 0, kind: input, shape index: {}]
  %s1 = inlined_call_operand.vmem [shape: f32[64,8,1], index: 1, kind: input, shape index: {}]
  %s2 = inlined_call_operand.hbm [shape: f32[8,8,300], index: 2, kind: output, shape index: {}]
  %s3 = sld [smem:[#allocation0]]
  $region18: #{tpu_custom_call.1} parent=0
    _
  %s5 = ssub.s32 1, %s3
  %s6 = scalar_select 0, %s5, %s3
  $region1: #{tpu_custom_call.1} parent=0
    #allocation2 [shape = 'u8[98304]{0}', space=vmem, size = 0x18000, scoped, tag = 'output window, operand 0, single buffered']
    #allocation3 [shape = 's32[1]{0}', space=sflag, size = 0x4, scoped, tag = 'scoped memory for tpu_custom_call.1']
    %7 = vsyncpa [#allocation3], 0
    // Predicated region
    $region2: #{tpu_custom_call.1} parent=1 // pred_check
      _
    $region3: #{tpu_custom_call.1} parent=1 // pred_check_branch
      %9 = sbr.rel (0) target = $region5
    $region4: #{tpu_custom_call.1} parent=1 // pred_region
      _
    $region5: #{tpu_custom_call.1} parent=1 // pred_fallthru
      _
    // Predicated region
    $region6: #{tpu_custom_call.1} parent=1 // pred_check
      _
    $region7: #{tpu_custom_call.1} parent=1 // pred_check_branch
      %11 = sbr.rel (0) target = $region9
    $region8: #{tpu_custom_call.1} parent=1 // pred_region
      _
    $region9: #{tpu_custom_call.1} parent=1 // pred_fallthru
      _
    %v12 = vld [vmem:[%s0] sm:$0xff]
    %v13 = vld [vmem:[%s0 + $0x8] sm:$0xff]
    %v14 = vld [vmem:[%s0 + $0x10] sm:$0xff]
    %v15 = vld [vmem:[%s0 + $0x18] sm:$0xff]
    %v16 = vld [vmem:[%s0 + $0x20] sm:$0xff]
    %v17 = vld [vmem:[%s0 + $0x28] sm:$0xff]
    %v18 = vld [vmem:[%s0 + $0x30] sm:$0xff]
    %v19 = vld [vmem:[%s0 + $0x38] sm:$0xff]
    %v20 = vld [vmem:[%s0 + $0x40] sm:$0xff]
    %v21 = vld [vmem:[%s0 + $0x48] sm:$0xff]
    %v22 = vld [vmem:[%s0 + $0x50] sm:$0xff]
    %v23 = vld [vmem:[%s0 + $0x58] sm:$0xff]
    %v24 = vld [vmem:[%s0 + $0x60] sm:$0xff]
    %v25 = vld [vmem:[%s0 + $0x68] sm:$0xff]
    %v26 = vld [vmem:[%s0 + $0x70] sm:$0xff]
    %v27 = vld [vmem:[%s0 + $0x78] sm:$0xff]
    %v28 = vld [vmem:[%s0 + $0x80] sm:$0xff]
    %v29 = vld [vmem:[%s0 + $0x88] sm:$0xff]
    %v30 = vld [vmem:[%s0 + $0x90] sm:$0xff]
    %v31 = vld [vmem:[%s0 + $0x98] sm:$0xff]
    %v32 = vld [vmem:[%s0 + $0xa0] sm:$0xff]
    %v33 = vld [vmem:[%s0 + $0xa8] sm:$0xff]
    %v34 = vld [vmem:[%s0 + $0xb0] sm:$0xff]
    %v35 = vld [vmem:[%s0 + $0xb8] sm:$0xff]
    %v36 = vld [vmem:[%s1] sm:$0xff]
    %v37 = vld [vmem:[%s1 + $0x8] sm:$0xff]
    %v38 = vld [vmem:[%s1 + $0x10] sm:$0xff]
    %v39 = vld [vmem:[%s1 + $0x18] sm:$0xff]
    %v40 = vld [vmem:[%s1 + $0x20] sm:$0xff]
    %v41 = vld [vmem:[%s1 + $0x28] sm:$0xff]
    %v42 = vld [vmem:[%s1 + $0x30] sm:$0xff]
    %v43 = vld [vmem:[%s1 + $0x38] sm:$0xff]
    %45 = vset.pattern.permute.xlu0 0
    %46 = vperm.xlu0 %45, %v36
    %v47 = vpop.permute.xlu0 %46
    %50 = vset.pattern.permute.xlu0 0
    %51 = vperm.xlu0 %50, %v37
    %v52 = vpop.permute.xlu0 %51
    %55 = vset.pattern.permute.xlu0 0
    %56 = vperm.xlu0 %55, %v38
    %v57 = vpop.permute.xlu0 %56
    %60 = vset.pattern.permute.xlu0 0
    %61 = vperm.xlu0 %60, %v39
    %v62 = vpop.permute.xlu0 %61
    %65 = vset.pattern.permute.xlu0 0
    %66 = vperm.xlu0 %65, %v40
    %v67 = vpop.permute.xlu0 %66
    %70 = vset.pattern.permute.xlu0 0
    %71 = vperm.xlu0 %70, %v41
    %v72 = vpop.permute.xlu0 %71
    %75 = vset.pattern.permute.xlu0 0
    %76 = vperm.xlu0 %75, %v42
    %v77 = vpop.permute.xlu0 %76
    %80 = vset.pattern.permute.xlu0 0
    %81 = vperm.xlu0 %80, %v43
    %v82 = vpop.permute.xlu0 %81
    %v84 = vadd.f32 %v12, %v47
    %v85 = vadd.f32 %v13, %v47
    %v86 = vadd.f32 %v14, %v47
    %v87 = vadd.f32 %v15, %v52
    %v88 = vadd.f32 %v16, %v52
    %v89 = vadd.f32 %v17, %v52
    %v90 = vadd.f32 %v18, %v57
    %v91 = vadd.f32 %v19, %v57
    %v92 = vadd.f32 %v20, %v57
    %v93 = vadd.f32 %v21, %v62
    %v94 = vadd.f32 %v22, %v62
    %v95 = vadd.f32 %v23, %v62
    %v96 = vadd.f32 %v24, %v67
    %v97 = vadd.f32 %v25, %v67
    %v98 = vadd.f32 %v26, %v67
    %v99 = vadd.f32 %v27, %v72
    %v100 = vadd.f32 %v28, %v72
    %v101 = vadd.f32 %v29, %v72
    %v102 = vadd.f32 %v30, %v77
    %v103 = vadd.f32 %v31, %v77
    %v104 = vadd.f32 %v32, %v77
    %v105 = vadd.f32 %v33, %v82
    %v106 = vadd.f32 %v34, %v82
    %v107 = vadd.f32 %v35, %v82
    %108 = vst [vmem:[#allocation2] sm:$0xff] %v84
    %109 = vst [vmem:[#allocation2 + $0x8] sm:$0xff] %v85
    %vm110 = vcmask 359424
    %111 = vst.msk [vmem:[#allocation2 + $0x10] sm:$0xff] %vm110, %v86
    %112 = vst [vmem:[#allocation2 + $0x18] sm:$0xff] %v87
    %113 = vst [vmem:[#allocation2 + $0x20] sm:$0xff] %v88
    %114 = vst.msk [vmem:[#allocation2 + $0x28] sm:$0xff] %vm110, %v89
    %115 = vst [vmem:[#allocation2 + $0x30] sm:$0xff] %v90
    %116 = vst [vmem:[#allocation2 + $0x38] sm:$0xff] %v91
    %117 = vst.msk [vmem:[#allocation2 + $0x40] sm:$0xff] %vm110, %v92
    %118 = vst [vmem:[#allocation2 + $0x48] sm:$0xff] %v93
    %119 = vst [vmem:[#allocation2 + $0x50] sm:$0xff] %v94
    %120 = vst.msk [vmem:[#allocation2 + $0x58] sm:$0xff] %vm110, %v95
    %121 = vst [vmem:[#allocation2 + $0x60] sm:$0xff] %v96
    %122 = vst [vmem:[#allocation2 + $0x68] sm:$0xff] %v97
    %123 = vst.msk [vmem:[#allocation2 + $0x70] sm:$0xff] %vm110, %v98
    %124 = vst [vmem:[#allocation2 + $0x78] sm:$0xff] %v99
    %125 = vst [vmem:[#allocation2 + $0x80] sm:$0xff] %v100
    %126 = vst.msk [vmem:[#allocation2 + $0x88] sm:$0xff] %vm110, %v101
    %127 = vst [vmem:[#allocation2 + $0x90] sm:$0xff] %v102
    %128 = vst [vmem:[#allocation2 + $0x98] sm:$0xff] %v103
    %129 = vst.msk [vmem:[#allocation2 + $0xa0] sm:$0xff] %vm110, %v104
    %130 = vst [vmem:[#allocation2 + $0xa8] sm:$0xff] %v105
    %131 = vst [vmem:[#allocation2 + $0xb0] sm:$0xff] %v106
    %132 = vst.msk [vmem:[#allocation2 + $0xb8] sm:$0xff] %vm110, %v107
    // Predicated region
    $region10: #{tpu_custom_call.1} parent=1 // pred_check
      _
    $region11: #{tpu_custom_call.1} parent=1 // pred_check_branch
      %134 = sbr.rel (0) target = $region13
    $region12: #{tpu_custom_call.1} parent=1 // pred_region
      %s136 = ssub.s32 3072, 3072
      %137 = vsyncadd [#allocation3], %s136
      %s138 = sshll.u32 [#allocation2], 4
      %s139 = int_to_ptr.vmem [resolvable:$true] %s138
      %144 = dma.vmem_to_hbm [thread:$0]  %s139, 3072, %s2, [#allocation3], 384, 384, 24
    $region13: #{tpu_custom_call.1} parent=1 // pred_fallthru
      _
    // Predicated region
    $region14: #{tpu_custom_call.1} parent=1 // pred_check
      _
    $region15: #{tpu_custom_call.1} parent=1 // pred_check_branch
      %146 = sbr.rel (0) target = $region17
    $region16: #{tpu_custom_call.1} parent=1 // pred_region
      %147 = dma.done [#allocation3], 3072
    $region17: #{tpu_custom_call.1} parent=1 // pred_fallthru
      _
    %148 = vsyncpa [#allocation3], 1

</llo_original>
